<compile_context>
chip_gen: v7x
topology: tpu7x:2x2x1
jax: 0.10.0
libtpu: 0.0.40
codegen_flags: <defaults>
</compile_context>

<pallas_src>
import jax
import jax.numpy as jnp
from jax.experimental import pallas as pl
from jax.experimental.pallas import tpu as pltpu

IN_DIM = 192
HID_DIM = 192
OUT_DIM = 7
PAD_OUT = 128          # lane-dense padded width for the classifier matmul (MXU only)
DEFAULT_TILE_B = 4096  # rows per grid step (multiple of 16); fits 32 MiB VMEM limit


def head_kernel(x_ref, w1_ref, b1_ref, w2_ref, b2_ref, o_ref):
    # x_ref:  [tb, 192] f32      w1_ref: [192, 192] bf16   b1_ref: [1, 192] f32
    # w2_ref: [192, 128] bf16    b2_ref: [1, 7]     f32    o_ref:  [tb, 7]  f32

    # Cast x -> bf16 inside the kernel (no separate wrapper-side HBM pass).
    x_bf = x_ref[...].astype(jnp.bfloat16)

    # l1: bf16 x bf16 -> f32 accumulation on the MXU.
    h = jnp.dot(x_bf, w1_ref[...], preferred_element_type=jnp.float32)
    h = h + b1_ref[...]

    # SiLU(h) = h * sigmoid(h), in f32 (v5e VPU has no bf16).
    # exp -> EUP, approx reciprocal -> EUP; frees VALU slots.
    h = h * pl.reciprocal(1.0 + jnp.exp(-h), approx=True)

    # cls: bf16 x bf16 -> f32 accumulation against the 128-wide padded W2
    # (MXU-friendly), but only the 7 real columns are written back to HBM.
    y = jnp.dot(h.astype(jnp.bfloat16), w2_ref[...],
                preferred_element_type=jnp.float32)
    o_ref[...] = (y[:, :OUT_DIM] + b2_ref[...]).astype(o_ref.dtype)


def head_forward(x, w1, b1, w2, b2, *, tile_b=None, core_parallel=False):
    """x: [B, 192] float32 -> [B, 7] float32.

    Set core_parallel=True on v7x to shard the batch grid axis across both
    TensorCores (no effect / keep False on single-TC v5e/v6e).
    """
    B, in_dim = x.shape
    assert in_dim == IN_DIM

    if tile_b is None:
        tile_b = B if B <= DEFAULT_TILE_B else DEFAULT_TILE_B
    if tile_b != B and tile_b % 16 != 0:
        # Multiple of 16: satisfies the (8,128) sublane rule and keeps the
        # in-kernel bf16 cast sublane-packed.
        tile_b = ((tile_b + 15) // 16) * 16
    grid = (pl.cdiv(B, tile_b),)

    # Weight prep (tiny, one-time; in real inference precompute these once).
    w1_bf = w1.astype(jnp.bfloat16)
    b1_2d = b1.reshape(1, HID_DIM).astype(jnp.float32)
    w2_pad = jnp.zeros((HID_DIM, PAD_OUT), jnp.bfloat16)
    w2_pad = w2_pad.at[:, :OUT_DIM].set(w2.astype(jnp.bfloat16))
    b2_2d = b2.reshape(1, OUT_DIM).astype(jnp.float32)

    cost = pl.CostEstimate(
        flops=2 * B * IN_DIM * HID_DIM + 2 * B * HID_DIM * PAD_OUT,
        transcendentals=2 * B * HID_DIM,
        bytes_accessed=(B * IN_DIM * 4 + B * OUT_DIM * 4
                        + IN_DIM * HID_DIM * 2 + HID_DIM * PAD_OUT * 2
                        + (HID_DIM + OUT_DIM) * 4),
    )

    dim_sem = (pltpu.CORE_PARALLEL,) if core_parallel else ("parallel",)

    out = pl.pallas_call(
        head_kernel,
        out_shape=jax.ShapeDtypeStruct((B, OUT_DIM), jnp.float32),
        grid_spec=pltpu.PrefetchScalarGridSpec(
            num_scalar_prefetch=0,
            grid=grid,
            in_specs=[
                pl.BlockSpec((tile_b, IN_DIM), lambda i: (i, 0)),    # x tile (f32)
                pl.BlockSpec((IN_DIM, HID_DIM), lambda i: (0, 0)),   # W1 (bf16)
                pl.BlockSpec((1, HID_DIM), lambda i: (0, 0)),        # b1 (f32)
                pl.BlockSpec((HID_DIM, PAD_OUT), lambda i: (0, 0)),  # W2 padded (bf16)
                pl.BlockSpec((1, OUT_DIM), lambda i: (0, 0)),        # b2 (f32)
            ],
            out_specs=pl.BlockSpec((tile_b, OUT_DIM), lambda i: (i, 0)),
        ),
        compiler_params=pltpu.CompilerParams(
            dimension_semantics=dim_sem,
            vmem_limit_bytes=32 << 20,  # headroom for tile_b=4096 on v5e's 16 MiB default
        ),
        cost_estimate=cost,
    )(x, w1_bf, b1_2d, w2_pad, b2_2d)

    return out.astype(x.dtype)


def init_params(key):
    """Deterministic init matching PyTorch nn.Linear default (uniform +-1/sqrt(fan_in)).

    Weights are stored as [in, out] (transposed vs. torch's [out, in]) so the
    kernel multiplies without a transpose.
    """
    k1, k2, k3, k4 = jax.random.split(key, 4)
    bound1 = 1.0 / jnp.sqrt(IN_DIM)
    w1 = jax.random.uniform(k1, (IN_DIM, HID_DIM), jnp.float32, -bound1, bound1)
    b1 = jax.random.uniform(k2, (1, HID_DIM), jnp.float32, -bound1, bound1)
    bound2 = 1.0 / jnp.sqrt(HID_DIM)
    w2 = jax.random.uniform(k3, (HID_DIM, OUT_DIM), jnp.float32, -bound2, bound2)
    b2 = jax.random.uniform(k4, (1, OUT_DIM), jnp.float32, -bound2, bound2)
    return w1, b1, w2, b2


def head_reference(x, w1, b1, w2, b2):
    """Reference with the same bf16-in / f32-accumulate matmul numerics."""
    h = jnp.dot(x.astype(jnp.bfloat16), w1.astype(jnp.bfloat16),
                preferred_element_type=jnp.float32) + b1.reshape(1, -1)
    h = h * jax.nn.sigmoid(h)
    y = jnp.dot(h.astype(jnp.bfloat16), w2.astype(jnp.bfloat16),
                preferred_element_type=jnp.float32) + b2.reshape(1, -1)
    return y


if __name__ == "__main__":
    key = jax.random.PRNGKey(0)
    kx, kp = jax.random.split(key)

    B = 64  # small batch for the self-test
    x = jax.random.normal(kx, (B, IN_DIM), jnp.float32)
    w1, b1, w2, b2 = init_params(kp)

    ref = head_reference(x, w1, b1, w2, b2)

    # Default tiling (single block at this small B).
    out = head_forward(x, w1, b1, w2, b2)
    out = jax.block_until_ready(out)
    assert out.shape == (B, OUT_DIM)
    assert jnp.allclose(out, ref, atol=1e-2, rtol=1e-2), "mismatch vs. reference"

    # Multi-step grid path (exercises batch tiling / pipelining / narrow store).
    out_tiled = head_forward(x, w1, b1, w2, b2, tile_b=16)
    out_tiled = jax.block_until_ready(out_tiled)
    assert out_tiled.shape == (B, OUT_DIM)
    assert jnp.allclose(out_tiled, ref, atol=1e-2, rtol=1e-2), "tiled mismatch vs. reference"

    print("KERNEL_OK")
</pallas_src>

<mosaic_0001>
module attributes {stable_mosaic.version = 11 : i64} {
  func.func @head_kernel(%arg0: i32, %arg1: memref<64x192xf32, #tpu.memory_space<vmem>>, %arg2: memref<192x192xbf16, #tpu.memory_space<vmem>>, %arg3: memref<1x192xf32, #tpu.memory_space<vmem>>, %arg4: memref<192x128xbf16, #tpu.memory_space<vmem>>, %arg5: memref<1x7xf32, #tpu.memory_space<vmem>>, %arg6: memref<64x7xf32, #tpu.memory_space<vmem>>) attributes {dimension_semantics = [#tpu.dimension_semantics<parallel>], iteration_bounds = array<i64: 1>, scalar_prefetch = 0 : i64, scratch_operands = 0 : i64, tpu.core_type = #tpu.core_type<tc>, window_params = [{transform_indices = @transform_0, window_bounds = array<i64: 64, 192>}, {pipeline_mode = #tpu.pipeline_mode<synchronous>, transform_indices = @transform_1, window_bounds = array<i64: 192, 192>}, {pipeline_mode = #tpu.pipeline_mode<synchronous>, transform_indices = @transform_2, window_bounds = array<i64: 1, 192>}, {pipeline_mode = #tpu.pipeline_mode<synchronous>, transform_indices = @transform_3, window_bounds = array<i64: 192, 128>}, {pipeline_mode = #tpu.pipeline_mode<synchronous>, transform_indices = @transform_4, window_bounds = array<i64: 1, 7>}, {transform_indices = @transform_5, window_bounds = array<i64: 64, 7>}]} {
    %c0 = arith.constant 0 : index
    %c0_0 = arith.constant 0 : index
    %0 = vector.load %arg1[%c0, %c0_0] : memref<64x192xf32, #tpu.memory_space<vmem>>, vector<64x192xf32>
    %1 = arith.truncf %0 : vector<64x192xf32> to vector<64x192xbf16>
    %c0_1 = arith.constant 0 : index
    %c0_2 = arith.constant 0 : index
    %2 = vector.load %arg2[%c0_1, %c0_2] : memref<192x192xbf16, #tpu.memory_space<vmem>>, vector<192x192xbf16>
    %cst = arith.constant dense<0.000000e+00> : vector<64x192xf32>
    %3 = tpu.matmul %1, %2, %cst {dimension_numbers = #tpu.dot_dimension_numbers<[1], [0], [0], [1], [0, 0, 1, 1], [], []>} : vector<64x192xbf16>, vector<192x192xbf16>, vector<64x192xf32> -> vector<64x192xf32>
    %c0_3 = arith.constant 0 : index
    %c0_4 = arith.constant 0 : index
    %4 = vector.load %arg3[%c0_3, %c0_4] : memref<1x192xf32, #tpu.memory_space<vmem>>, vector<1x192xf32>
    %5 = vector.broadcast %4 : vector<1x192xf32> to vector<64x192xf32>
    %6 = arith.addf %3, %5 : vector<64x192xf32>
    %cst_5 = arith.constant 0.000000e+00 : f32
    %7 = vector.broadcast %cst_5 : f32 to vector<64x192xf32>
    %8 = arith.subf %7, %6 : vector<64x192xf32>
    %9 = math.exp %8 : vector<64x192xf32>
    %cst_6 = arith.constant 1.000000e+00 : f32
    %10 = vector.broadcast %cst_6 : f32 to vector<64x192xf32>
    %11 = arith.addf %10, %9 : vector<64x192xf32>
    %12 = tpu.reciprocal %11 {approx = true} : vector<64x192xf32> -> vector<64x192xf32>
    %13 = arith.mulf %6, %12 : vector<64x192xf32>
    %14 = arith.truncf %13 : vector<64x192xf32> to vector<64x192xbf16>
    %c0_7 = arith.constant 0 : index
    %c0_8 = arith.constant 0 : index
    %15 = vector.load %arg4[%c0_7, %c0_8] : memref<192x128xbf16, #tpu.memory_space<vmem>>, vector<192x128xbf16>
    %cst_9 = arith.constant dense<0.000000e+00> : vector<64x128xf32>
    %16 = tpu.matmul %14, %15, %cst_9 {dimension_numbers = #tpu.dot_dimension_numbers<[1], [0], [0], [1], [0, 0, 1, 1], [], []>} : vector<64x192xbf16>, vector<192x128xbf16>, vector<64x128xf32> -> vector<64x128xf32>
    %17 = vector.extract_strided_slice %16 {offsets = [0, 0], sizes = [64, 7], strides = [1, 1]} : vector<64x128xf32> to vector<64x7xf32>
    %c0_10 = arith.constant 0 : index
    %c0_11 = arith.constant 0 : index
    %18 = vector.load %arg5[%c0_10, %c0_11] : memref<1x7xf32, #tpu.memory_space<vmem>>, vector<1x7xf32>
    %19 = vector.broadcast %18 : vector<1x7xf32> to vector<64x7xf32>
    %20 = arith.addf %17, %19 : vector<64x7xf32>
    %c0_12 = arith.constant 0 : index
    %c0_13 = arith.constant 0 : index
    %21 = vector.load %arg6[%c0_12, %c0_13] : memref<64x7xf32, #tpu.memory_space<vmem>>, vector<64x7xf32>
    tpu.vector_store %arg6[%c0_12, %c0_13], %20 {strides = array<i32>} : memref<64x7xf32, #tpu.memory_space<vmem>>, vector<64x7xf32>,
    return
  }
  func.func @transform_0(%arg0: i32) -> (i32, i32) {
    %c0_i32 = arith.constant 0 : i32
    %c0_i32_0 = arith.constant 0 : i32
    return %arg0, %c0_i32 : i32, i32
  }
  func.func @transform_1(%arg0: i32) -> (i32, i32) {
    %c0_i32 = arith.constant 0 : i32
    %c0_i32_0 = arith.constant 0 : i32
    %c0_i32_1 = arith.constant 0 : i32
    return %c0_i32, %c0_i32_0 : i32, i32
  }
  func.func @transform_2(%arg0: i32) -> (i32, i32) {
    %c0_i32 = arith.constant 0 : i32
    %c0_i32_0 = arith.constant 0 : i32
    %c0_i32_1 = arith.constant 0 : i32
    return %c0_i32, %c0_i32_0 : i32, i32
  }
  func.func @transform_3(%arg0: i32) -> (i32, i32) {
    %c0_i32 = arith.constant 0 : i32
    %c0_i32_0 = arith.constant 0 : i32
    %c0_i32_1 = arith.constant 0 : i32
    return %c0_i32, %c0_i32_0 : i32, i32
  }
  func.func @transform_4(%arg0: i32) -> (i32, i32) {
    %c0_i32 = arith.constant 0 : i32
    %c0_i32_0 = arith.constant 0 : i32
    %c0_i32_1 = arith.constant 0 : i32
    return %c0_i32, %c0_i32_0 : i32, i32
  }
  func.func @transform_5(%arg0: i32) -> (i32, i32) {
    %c0_i32 = arith.constant 0 : i32
    %c0_i32_0 = arith.constant 0 : i32
    return %arg0, %c0_i32 : i32, i32
  }
}

</mosaic_0001>

<llo_original>
// kernel: tpu_custom_call.1
$region0: #{tpu_custom_call.1}
  #allocation0 [shape = 'u32[]', space=smem, size = 0x4, offset = 0x4, fixed_abs, tag = 'smem constant byte address 0x4 - core index']
  #allocation1 [shape = 'u32[144,128]{1,0:T(1,128)}', space=vmem, size = 0x12000, scoped, tag = 'internal scratch']
  %s0 = inlined_call_operand.hbm [shape: f32[64,192], index: 0, kind: input, shape index: {}]
  %s1 = inlined_call_operand.hbm [shape: bf16[192,192], index: 1, kind: input, shape index: {}]
  %s2 = inlined_call_operand.vmem [shape: f32[1,192], index: 2, kind: input, shape index: {}]
  %s3 = inlined_call_operand.hbm [shape: bf16[192,128], index: 3, kind: input, shape index: {}]
  %s4 = inlined_call_operand.vmem [shape: f32[1,7], index: 4, kind: input, shape index: {}]
  %s5 = inlined_call_operand.vmem [shape: f32[64,7], index: 5, kind: output, shape index: {}]
  %s6 = sld [smem:[#allocation0]]
  $region42: #{tpu_custom_call.1} parent=0
    _
  %s8 = ssub.s32 1, %s6
  %s9 = scalar_select 0, %s8, %s6
  $region1: #{tpu_custom_call.1} parent=0
    #allocation2 [shape = 'u8[65536]{0}', space=vmem, size = 0x10000, scoped, tag = 'input window, operand 0, single buffered']
    #allocation3 [shape = 's32[1]{0}', space=sflag, size = 0x4, scoped, tag = 'scoped memory for tpu_custom_call.1']
    #allocation4 [shape = 'u8[98304]{0}', space=vmem, size = 0x18000, scoped, tag = 'input window, operand 1, single buffered']
    #allocation5 [shape = 's32[1]{0}', space=sflag, size = 0x4, scoped, tag = 'scoped memory for tpu_custom_call.1']
    #allocation6 [shape = 'u8[49152]{0}', space=vmem, size = 0xc000, scoped, tag = 'input window, operand 3, single buffered']
    %10 = vsyncpa [#allocation3], 0
    %11 = vsyncpa [#allocation5], 0
    // Predicated region
    $region2: #{tpu_custom_call.1} parent=1 // pred_check
      _
    $region3: #{tpu_custom_call.1} parent=1 // pred_check_branch
      %13 = sbr.rel (0) target = $region5
    $region4: #{tpu_custom_call.1} parent=1 // pred_region
      %s15 = ssub.s32 2048, 2048
      %16 = vsyncadd [#allocation3], %s15
      %s17 = sshll.u32 [#allocation2], 4
      %s18 = int_to_ptr.vmem [resolvable:$true] %s17
      %23 = dma.hbm_to_vmem [thread:$0]  %s0, 2048, %s18, [#allocation3], 256, 256, 16
    $region5: #{tpu_custom_call.1} parent=1 // pred_fallthru
      _
    // Predicated region
    $region6: #{tpu_custom_call.1} parent=1 // pred_check
      _
    $region7: #{tpu_custom_call.1} parent=1 // pred_check_branch
      %25 = sbr.rel (0) target = $region9
    $region8: #{tpu_custom_call.1} parent=1 // pred_region
      %s27 = ssub.s32 3072, 3072
      %28 = vsyncadd [#allocation5], %s27
      %s29 = sshll.u32 [#allocation4], 4
      %s30 = int_to_ptr.vmem [resolvable:$true] %s29
      %35 = dma.hbm_to_vmem [thread:$0]  %s1, 3072, %s30, [#allocation5], 128, 128, 8
    $region9: #{tpu_custom_call.1} parent=1 // pred_fallthru
      _
    // Predicated region
    $region10: #{tpu_custom_call.1} parent=1 // pred_check
      _
    $region11: #{tpu_custom_call.1} parent=1 // pred_check_branch
      %37 = sbr.rel (0) target = $region13
    $region12: #{tpu_custom_call.1} parent=1 // pred_region
      _
    $region13: #{tpu_custom_call.1} parent=1 // pred_fallthru
      _
    // Predicated region
    $region14: #{tpu_custom_call.1} parent=1 // pred_check
      _
    $region15: #{tpu_custom_call.1} parent=1 // pred_check_branch
      %39 = sbr.rel (0) target = $region17
    $region16: #{tpu_custom_call.1} parent=1 // pred_region
      %s41 = ssub.s32 1536, 1536
      %42 = vsyncadd [#allocation5], %s41
      %s43 = sshll.u32 [#allocation6], 4
      %s44 = int_to_ptr.vmem [resolvable:$true] %s43
      %49 = dma.hbm_to_vmem [thread:$0]  %s3, 1536, %s44, [#allocation5], 64, 64, 4
    $region17: #{tpu_custom_call.1} parent=1 // pred_fallthru
      _
    // Predicated region
    $region18: #{tpu_custom_call.1} parent=1 // pred_check
      _
    $region19: #{tpu_custom_call.1} parent=1 // pred_check_branch
      %51 = sbr.rel (0) target = $region21
    $region20: #{tpu_custom_call.1} parent=1 // pred_region
      _
    $region21: #{tpu_custom_call.1} parent=1 // pred_fallthru
      _
    // Predicated region
    $region22: #{tpu_custom_call.1} parent=1 // pred_check
      _
    $region23: #{tpu_custom_call.1} parent=1 // pred_check_branch
      %53 = sbr.rel (0) target = $region25
    $region24: #{tpu_custom_call.1} parent=1 // pred_region
      %54 = dma.done [#allocation3], 2048
    $region25: #{tpu_custom_call.1} parent=1 // pred_fallthru
      _
    // Predicated region
    $region26: #{tpu_custom_call.1} parent=1 // pred_check
      _
    $region27: #{tpu_custom_call.1} parent=1 // pred_check_branch
      %56 = sbr.rel (0) target = $region29
    $region28: #{tpu_custom_call.1} parent=1 // pred_region
      %57 = dma.done [#allocation5], 3072
    $region29: #{tpu_custom_call.1} parent=1 // pred_fallthru
      _
    // Predicated region
    $region30: #{tpu_custom_call.1} parent=1 // pred_check
      _
    $region31: #{tpu_custom_call.1} parent=1 // pred_check_branch
      %59 = sbr.rel (0) target = $region33
    $region32: #{tpu_custom_call.1} parent=1 // pred_region
      %60 = dma.done [#allocation5], 1536
    $region33: #{tpu_custom_call.1} parent=1 // pred_fallthru
      _
    %v62 = vld [vmem:[#allocation2] sm:$0xff]
    %v63 = vld [vmem:[#allocation2 + $0x8] sm:$0xff]
    %v64 = vld [vmem:[#allocation2 + $0x10] sm:$0xff]
    %v65 = vld [vmem:[#allocation2 + $0x18] sm:$0xff]
    %v66 = vld [vmem:[#allocation2 + $0x20] sm:$0xff]
    %v67 = vld [vmem:[#allocation2 + $0x28] sm:$0xff]
    %v68 = vld [vmem:[#allocation2 + $0x30] sm:$0xff]
    %v69 = vld [vmem:[#allocation2 + $0x38] sm:$0xff]
    %v70 = vld [vmem:[#allocation2 + $0x40] sm:$0xff]
    %v71 = vld [vmem:[#allocation2 + $0x48] sm:$0xff]
    %v72 = vld [vmem:[#allocation2 + $0x50] sm:$0xff]
    %v73 = vld [vmem:[#allocation2 + $0x58] sm:$0xff]
    %v74 = vld [vmem:[#allocation2 + $0x60] sm:$0xff]
    %v75 = vld [vmem:[#allocation2 + $0x68] sm:$0xff]
    %v76 = vld [vmem:[#allocation2 + $0x70] sm:$0xff]
    %v77 = vld [vmem:[#allocation2 + $0x78] sm:$0xff]
    %v78 = vpack.c.bf16 %v64, %v62
    %v79 = vpack.c.bf16 %v65, %v63
    %v80 = vpack.c.bf16 %v68, %v66
    %v81 = vpack.c.bf16 %v69, %v67
    %v82 = vpack.c.bf16 %v72, %v70
    %v83 = vpack.c.bf16 %v73, %v71
    %v84 = vpack.c.bf16 %v76, %v74
    %v85 = vpack.c.bf16 %v77, %v75
    %v86 = vld [vmem:[#allocation4] sm:$0xff]
    %v87 = vld [vmem:[#allocation4 + $0x8] sm:$0xff]
    %v88 = vld [vmem:[#allocation4 + $0x10] sm:$0xff]
    %v89 = vld [vmem:[#allocation4 + $0x18] sm:$0xff]
    %v90 = vld [vmem:[#allocation4 + $0x20] sm:$0xff]
    %v91 = vld [vmem:[#allocation4 + $0x28] sm:$0xff]
    %v92 = vld [vmem:[#allocation4 + $0x30] sm:$0xff]
    %v93 = vld [vmem:[#allocation4 + $0x38] sm:$0xff]
    %v94 = vld [vmem:[#allocation4 + $0x40] sm:$0xff]
    %v95 = vld [vmem:[#allocation4 + $0x48] sm:$0xff]
    %v96 = vld [vmem:[#allocation4 + $0x50] sm:$0xff]
    %v97 = vld [vmem:[#allocation4 + $0x58] sm:$0xff]
    %v98 = vld [vmem:[#allocation4 + $0x60] sm:$0xff]
    %v99 = vld [vmem:[#allocation4 + $0x68] sm:$0xff]
    %v100 = vld [vmem:[#allocation4 + $0x70] sm:$0xff]
    %v101 = vld [vmem:[#allocation4 + $0x78] sm:$0xff]
    %v102 = vld [vmem:[#allocation4 + $0x80] sm:$0xff]
    %v103 = vld [vmem:[#allocation4 + $0x88] sm:$0xff]
    %v104 = vld [vmem:[#allocation4 + $0x90] sm:$0xff]
    %v105 = vld [vmem:[#allocation4 + $0x98] sm:$0xff]
    %v106 = vld [vmem:[#allocation4 + $0xa0] sm:$0xff]
    %v107 = vld [vmem:[#allocation4 + $0xa8] sm:$0xff]
    %v108 = vld [vmem:[#allocation4 + $0xb0] sm:$0xff]
    %v109 = vld [vmem:[#allocation4 + $0xb8] sm:$0xff]
    %v110 = vld [vmem:[%s2] sm:$0x3]
    %v112 = vlaneseq
    %v113 = vshrl.u32 %v112, 7
    %v114 = vsub.s32 0, %v113
    %v115 = vrot.slane %v110, %v114
    %v116 = vlaneseq
    %v117 = vshrl.u32 %v116, 7
    %v118 = vsub.s32 1, %v117
    %v119 = vrot.slane %v110, %v118
    %v146 = vunpack.c.l.b16 %v86
    %v147 = vunpack.c.h.b16 %v86
    %v148 = vunpack.c.l.b16 %v87
    %v149 = vunpack.c.h.b16 %v87
    %v150 = vunpack.c.l.b16 %v88
    %v151 = vunpack.c.h.b16 %v88
    %v152 = vunpack.c.l.b16 %v89
    %v153 = vunpack.c.h.b16 %v89
    %v154 = vunpack.c.l.b16 %v90
    %v155 = vunpack.c.h.b16 %v90
    %v156 = vunpack.c.l.b16 %v91
    %v157 = vunpack.c.h.b16 %v91
    %v158 = vunpack.c.l.b16 %v92
    %v159 = vunpack.c.h.b16 %v92
    %v160 = vunpack.c.l.b16 %v93
    %v161 = vunpack.c.h.b16 %v93
    %v162 = vunpack.c.l.b16 %v94
    %v163 = vunpack.c.h.b16 %v94
    %v164 = vunpack.c.l.b16 %v95
    %v165 = vunpack.c.h.b16 %v95
    %v166 = vunpack.c.l.b16 %v96
    %v167 = vunpack.c.h.b16 %v96
    %v168 = vunpack.c.l.b16 %v97
    %v169 = vunpack.c.h.b16 %v97
    %v170 = vunpack.c.l.b16 %v98
    %v171 = vunpack.c.h.b16 %v98
    %v172 = vunpack.c.l.b16 %v99
    %v173 = vunpack.c.h.b16 %v99
    %v174 = vunpack.c.l.b16 %v100
    %v175 = vunpack.c.h.b16 %v100
    %v176 = vunpack.c.l.b16 %v101
    %v177 = vunpack.c.h.b16 %v101
    %v178 = vunpack.c.l.b16 %v102
    %v179 = vunpack.c.h.b16 %v102
    %v180 = vunpack.c.l.b16 %v103
    %v181 = vunpack.c.h.b16 %v103
    %v182 = vunpack.c.l.b16 %v104
    %v183 = vunpack.c.h.b16 %v104
    %v184 = vunpack.c.l.b16 %v105
    %v185 = vunpack.c.h.b16 %v105
    %v186 = vunpack.c.l.b16 %v106
    %v187 = vunpack.c.h.b16 %v106
    %v188 = vunpack.c.l.b16 %v107
    %v189 = vunpack.c.h.b16 %v107
    %v190 = vunpack.c.l.b16 %v108
    %v191 = vunpack.c.h.b16 %v108
    %v192 = vunpack.c.l.b16 %v109
    %v193 = vunpack.c.h.b16 %v109
    %v194 = vpack.c.b16 %v148, %v146
    %v195 = vpack.c.b16 %v149, %v147
    %v196 = vpack.c.b16 %v152, %v150
    %v197 = vpack.c.b16 %v153, %v151
    %v198 = vpack.c.b16 %v156, %v154
    %v199 = vpack.c.b16 %v157, %v155
    %v200 = vpack.c.b16 %v160, %v158
    %v201 = vpack.c.b16 %v161, %v159
    %v202 = vpack.c.b16 %v164, %v162
    %v203 = vpack.c.b16 %v165, %v163
    %v204 = vpack.c.b16 %v168, %v166
    %v205 = vpack.c.b16 %v169, %v167
    %v206 = vpack.c.b16 %v172, %v170
    %v207 = vpack.c.b16 %v173, %v171
    %v208 = vpack.c.b16 %v176, %v174
    %v209 = vpack.c.b16 %v177, %v175
    %v210 = vpack.c.b16 %v180, %v178
    %v211 = vpack.c.b16 %v181, %v179
    %v212 = vpack.c.b16 %v184, %v182
    %v213 = vpack.c.b16 %v185, %v183
    %v214 = vpack.c.b16 %v188, %v186
    %v215 = vpack.c.b16 %v189, %v187
    %v216 = vpack.c.b16 %v192, %v190
    %v217 = vpack.c.b16 %v193, %v191
    %vm242 = vcmask 523264
    %v244 = vsel %vm242, %v79, 0
    %v247 = vsel %vm242, %v81, 0
    %v250 = vsel %vm242, %v83, 0
    %v253 = vsel %vm242, %v85, 0
    %255 = vmatprep.subr.bf16.mxu0 %v195
    %256 = vmatpush1.bf16.msra.mxu0 %v194
    %257 = vmatprep.subr.bf16.mxu0 %v197
    %258 = vmatpush1.bf16.msra.mxu0 %v196
    %259 = vmatprep.subr.bf16.mxu0 %v199
    %260 = vmatpush1.bf16.msra.mxu0 %v198
    %261 = vmatprep.subr.bf16.mxu0 %v201
    %262 = vmatpush1.bf16.msra.mxu0 %v200
    %263 = vmatprep.subr.bf16.mxu0 %v203
    %264 = vmatpush1.bf16.msra.mxu0 %v202
    %265 = vmatprep.subr.bf16.mxu0 %v205
    %266 = vmatpush1.bf16.msra.mxu0 %v204
    %267 = vmatprep.subr.bf16.mxu0 %v207
    %268 = vmatpush1.bf16.msra.mxu0 %v206
    %269 = vmatprep.subr.bf16.mxu0 %v209
    %270 = vmatpush1.bf16.msra.mxu0 %v208
    %271 = vmatprep.subr.bf16.mxu0 %v211
    %272 = vmatpush1.bf16.msra.mxu0 %v210
    %273 = vmatprep.subr.bf16.mxu0 %v213
    %274 = vmatpush1.bf16.msra.mxu0 %v212
    %275 = vmatprep.subr.bf16.mxu0 %v215
    %276 = vmatpush1.bf16.msra.mxu0 %v214
    %277 = vmatprep.subr.bf16.mxu0 %v217
    %278 = vmatpush1.bf16.msra.mxu0 %v216
    %279 = vmatprep.subr.bf16.mxu0 0
    %280 = vmatpush1.bf16.msra.mxu0 0
    %281 = vmatprep.subr.bf16.mxu0 0
    %282 = vmatpush1.bf16.msra.mxu0 0
    %283 = vmatprep.subr.bf16.mxu0 0
    %284 = vmatpush1.bf16.msra.mxu0 0
    %285 = vmatprep.subr.bf16.mxu0 0
    %286 = vmatpush1.bf16.msra.mxu0 0
    %287 = vmatprep.mubr.bf16.mxu0 %v244
    %288 = vmatmul.mubr.bf16.gmra.mrb[0].mxu0 %v78
    %v289 = vpop.f32.mrb[0].mxu0
    %v290 = vadd.f32 %v115, %v289
    %v291 = vpop.f32.mrb[0].mxu0
    %v292 = vadd.f32 %v119, %v291
    %v293 = vpop.f32.mrb[0].mxu0
    %v294 = vadd.f32 %v115, %v293
    %v295 = vpop.f32.mrb[0].mxu0
    %v296 = vadd.f32 %v119, %v295
    %297 = vmatprep.mubr.bf16.mxu0 %v247
    %298 = vmatmul.mubr.bf16.gmra.mrb[0].mxu0 %v80
    %v299 = vpop.f32.mrb[0].mxu0
    %v300 = vadd.f32 %v115, %v299
    %v301 = vpop.f32.mrb[0].mxu0
    %v302 = vadd.f32 %v119, %v301
    %v303 = vpop.f32.mrb[0].mxu0
    %v304 = vadd.f32 %v115, %v303
    %v305 = vpop.f32.mrb[0].mxu0
    %v306 = vadd.f32 %v119, %v305
    %307 = vmatprep.mubr.bf16.mxu0 %v250
    %308 = vmatmul.mubr.bf16.gmra.mrb[0].mxu0 %v82
    %v309 = vpop.f32.mrb[0].mxu0
    %v310 = vadd.f32 %v115, %v309
    %v311 = vpop.f32.mrb[0].mxu0
    %v312 = vadd.f32 %v119, %v311
    %v313 = vpop.f32.mrb[0].mxu0
    %v314 = vadd.f32 %v115, %v313
    %v315 = vpop.f32.mrb[0].mxu0
    %v316 = vadd.f32 %v119, %v315
    %317 = vmatprep.mubr.bf16.mxu0 %v253
    %318 = vmatmul.mubr.bf16.gmra.mrb[0].mxu0 %v84
    %v319 = vpop.f32.mrb[0].mxu0
    %v320 = vadd.f32 %v115, %v319
    %v321 = vpop.f32.mrb[0].mxu0
    %v322 = vadd.f32 %v119, %v321
    %v323 = vpop.f32.mrb[0].mxu0
    %v324 = vadd.f32 %v115, %v323
    %v325 = vpop.f32.mrb[0].mxu0
    %v326 = vadd.f32 %v119, %v325
    %327 = vdwg.mxu0
    %v328 = vsub.f32 0.0, %v290
    %v329 = vsub.f32 0.0, %v292
    %v330 = vsub.f32 0.0, %v294
    %v331 = vsub.f32 0.0, %v296
    %v332 = vsub.f32 0.0, %v300
    %v333 = vsub.f32 0.0, %v302
    %v334 = vsub.f32 0.0, %v304
    %v335 = vsub.f32 0.0, %v306
    %v336 = vsub.f32 0.0, %v310
    %v337 = vsub.f32 0.0, %v312
    %v338 = vsub.f32 0.0, %v314
    %v339 = vsub.f32 0.0, %v316
    %v340 = vsub.f32 0.0, %v320
    %v341 = vsub.f32 0.0, %v322
    %v342 = vsub.f32 0.0, %v324
    %v343 = vsub.f32 0.0, %v326
    %v344 = vmul.f32 %v328, 1.442695
    %v345 = vpow.pop %v344
    %v346 = vmul.f32 %v329, 1.442695
    %v347 = vpow.pop %v346
    %v348 = vmul.f32 %v330, 1.442695
    %v349 = vpow.pop %v348
    %v350 = vmul.f32 %v331, 1.442695
    %v351 = vpow.pop %v350
    %v352 = vmul.f32 %v332, 1.442695
    %v353 = vpow.pop %v352
    %v354 = vmul.f32 %v333, 1.442695
    %v355 = vpow.pop %v354
    %v356 = vmul.f32 %v334, 1.442695
    %v357 = vpow.pop %v356
    %v358 = vmul.f32 %v335, 1.442695
    %v359 = vpow.pop %v358
    %v360 = vmul.f32 %v336, 1.442695
    %v361 = vpow.pop %v360
    %v362 = vmul.f32 %v337, 1.442695
    %v363 = vpow.pop %v362
    %v364 = vmul.f32 %v338, 1.442695
    %v365 = vpow.pop %v364
    %v366 = vmul.f32 %v339, 1.442695
    %v367 = vpow.pop %v366
    %v368 = vmul.f32 %v340, 1.442695
    %v369 = vpow.pop %v368
    %v370 = vmul.f32 %v341, 1.442695
    %v371 = vpow.pop %v370
    %v372 = vmul.f32 %v342, 1.442695
    %v373 = vpow.pop %v372
    %v374 = vmul.f32 %v343, 1.442695
    %v375 = vpow.pop %v374
    %v376 = vadd.f32 %v345, 1.0
    %v377 = vadd.f32 %v347, 1.0
    %v378 = vadd.f32 %v349, 1.0
    %v379 = vadd.f32 %v351, 1.0
    %v380 = vadd.f32 %v353, 1.0
    %v381 = vadd.f32 %v355, 1.0
    %v382 = vadd.f32 %v357, 1.0
    %v383 = vadd.f32 %v359, 1.0
    %v384 = vadd.f32 %v361, 1.0
    %v385 = vadd.f32 %v363, 1.0
    %v386 = vadd.f32 %v365, 1.0
    %v387 = vadd.f32 %v367, 1.0
    %v388 = vadd.f32 %v369, 1.0
    %v389 = vadd.f32 %v371, 1.0
    %v390 = vadd.f32 %v373, 1.0
    %v391 = vadd.f32 %v375, 1.0
    %v392 = vrcp.pop %v376
    %v393 = vrcp.pop %v377
    %v394 = vrcp.pop %v378
    %v395 = vrcp.pop %v379
    %v396 = vrcp.pop %v380
    %v397 = vrcp.pop %v381
    %v398 = vrcp.pop %v382
    %v399 = vrcp.pop %v383
    %v400 = vrcp.pop %v384
    %v401 = vrcp.pop %v385
    %v402 = vrcp.pop %v386
    %v403 = vrcp.pop %v387
    %v404 = vrcp.pop %v388
    %v405 = vrcp.pop %v389
    %v406 = vrcp.pop %v390
    %v407 = vrcp.pop %v391
    %v408 = vmul.f32 %v290, %v392
    %v409 = vmul.f32 %v292, %v393
    %v410 = vmul.f32 %v294, %v394
    %v411 = vmul.f32 %v296, %v395
    %v412 = vmul.f32 %v300, %v396
    %v413 = vmul.f32 %v302, %v397
    %v414 = vmul.f32 %v304, %v398
    %v415 = vmul.f32 %v306, %v399
    %v416 = vmul.f32 %v310, %v400
    %v417 = vmul.f32 %v312, %v401
    %v418 = vmul.f32 %v314, %v402
    %v419 = vmul.f32 %v316, %v403
    %v420 = vmul.f32 %v320, %v404
    %v421 = vmul.f32 %v322, %v405
    %v422 = vmul.f32 %v324, %v406
    %v423 = vmul.f32 %v326, %v407
    %v424 = vpack.c.bf16 %v410, %v408
    %v425 = vpack.c.bf16 %v411, %v409
    %v426 = vpack.c.bf16 %v414, %v412
    %v427 = vpack.c.bf16 %v415, %v413
    %v428 = vpack.c.bf16 %v418, %v416
    %v429 = vpack.c.bf16 %v419, %v417
    %v430 = vpack.c.bf16 %v422, %v420
    %v431 = vpack.c.bf16 %v423, %v421
    %v432 = vld [vmem:[#allocation6] sm:$0xf]
    %v433 = vld [vmem:[#allocation6 + $0x4] sm:$0xf]
    %v434 = vld [vmem:[#allocation6 + $0x8] sm:$0xf]
    %v435 = vld [vmem:[#allocation6 + $0xc] sm:$0xf]
    %v436 = vld [vmem:[#allocation6 + $0x10] sm:$0xf]
    %v437 = vld [vmem:[#allocation6 + $0x14] sm:$0xf]
    %v438 = vld [vmem:[#allocation6 + $0x18] sm:$0xf]
    %v439 = vld [vmem:[#allocation6 + $0x1c] sm:$0xf]
    %v440 = vld [vmem:[#allocation6 + $0x20] sm:$0xf]
    %v441 = vld [vmem:[#allocation6 + $0x24] sm:$0xf]
    %v442 = vld [vmem:[#allocation6 + $0x28] sm:$0xf]
    %v443 = vld [vmem:[#allocation6 + $0x2c] sm:$0xf]
    %v444 = vld [vmem:[#allocation6 + $0x30] sm:$0xf]
    %v445 = vld [vmem:[#allocation6 + $0x34] sm:$0xf]
    %v446 = vld [vmem:[#allocation6 + $0x38] sm:$0xf]
    %v447 = vld [vmem:[#allocation6 + $0x3c] sm:$0xf]
    %v448 = vld [vmem:[#allocation6 + $0x40] sm:$0xf]
    %v449 = vld [vmem:[#allocation6 + $0x44] sm:$0xf]
    %v450 = vld [vmem:[#allocation6 + $0x48] sm:$0xf]
    %v451 = vld [vmem:[#allocation6 + $0x4c] sm:$0xf]
    %v452 = vld [vmem:[#allocation6 + $0x50] sm:$0xf]
    %v453 = vld [vmem:[#allocation6 + $0x54] sm:$0xf]
    %v454 = vld [vmem:[#allocation6 + $0x58] sm:$0xf]
    %v455 = vld [vmem:[#allocation6 + $0x5c] sm:$0xf]
    %v480 = vunpack.c.l.b16 %v432
    %v481 = vunpack.c.l.b16 %v433
    %v482 = vunpack.c.l.b16 %v434
    %v483 = vunpack.c.l.b16 %v435
    %v484 = vunpack.c.l.b16 %v436
    %v485 = vunpack.c.l.b16 %v437
    %v486 = vunpack.c.l.b16 %v438
    %v487 = vunpack.c.l.b16 %v439
    %v488 = vunpack.c.l.b16 %v440
    %v489 = vunpack.c.l.b16 %v441
    %v490 = vunpack.c.l.b16 %v442
    %v491 = vunpack.c.l.b16 %v443
    %v492 = vunpack.c.l.b16 %v444
    %v493 = vunpack.c.l.b16 %v445
    %v494 = vunpack.c.l.b16 %v446
    %v495 = vunpack.c.l.b16 %v447
    %v496 = vunpack.c.l.b16 %v448
    %v497 = vunpack.c.l.b16 %v449
    %v498 = vunpack.c.l.b16 %v450
    %v499 = vunpack.c.l.b16 %v451
    %v500 = vunpack.c.l.b16 %v452
    %v501 = vunpack.c.l.b16 %v453
    %v502 = vunpack.c.l.b16 %v454
    %v503 = vunpack.c.l.b16 %v455
    %v504 = vpack.c.b16 %v481, %v480
    %v505 = vpack.c.b16 %v483, %v482
    %v506 = vpack.c.b16 %v485, %v484
    %v507 = vpack.c.b16 %v487, %v486
    %v508 = vpack.c.b16 %v489, %v488
    %v509 = vpack.c.b16 %v491, %v490
    %v510 = vpack.c.b16 %v493, %v492
    %v511 = vpack.c.b16 %v495, %v494
    %v512 = vpack.c.b16 %v497, %v496
    %v513 = vpack.c.b16 %v499, %v498
    %v514 = vpack.c.b16 %v501, %v500
    %v515 = vpack.c.b16 %v503, %v502
    %v529 = vsel %vm242, %v425, 0
    %v532 = vsel %vm242, %v427, 0
    %v535 = vsel %vm242, %v429, 0
    %v538 = vsel %vm242, %v431, 0
    %540 = vmatprep.subr.bf16.mxu0 0
    %541 = vmatpush1.bf16.msra.mxu0 %v504
    %542 = vmatprep.subr.bf16.mxu0 0
    %543 = vmatpush1.bf16.msra.mxu0 %v505
    %544 = vmatprep.subr.bf16.mxu0 0
    %545 = vmatpush1.bf16.msra.mxu0 %v506
    %546 = vmatprep.subr.bf16.mxu0 0
    %547 = vmatpush1.bf16.msra.mxu0 %v507
    %548 = vmatprep.subr.bf16.mxu0 0
    %549 = vmatpush1.bf16.msra.mxu0 %v508
    %550 = vmatprep.subr.bf16.mxu0 0
    %551 = vmatpush1.bf16.msra.mxu0 %v509
    %552 = vmatprep.subr.bf16.mxu0 0
    %553 = vmatpush1.bf16.msra.mxu0 %v510
    %554 = vmatprep.subr.bf16.mxu0 0
    %555 = vmatpush1.bf16.msra.mxu0 %v511
    %556 = vmatprep.subr.bf16.mxu0 0
    %557 = vmatpush1.bf16.msra.mxu0 %v512
    %558 = vmatprep.subr.bf16.mxu0 0
    %559 = vmatpush1.bf16.msra.mxu0 %v513
    %560 = vmatprep.subr.bf16.mxu0 0
    %561 = vmatpush1.bf16.msra.mxu0 %v514
    %562 = vmatprep.subr.bf16.mxu0 0
    %563 = vmatpush1.bf16.msra.mxu0 %v515
    %564 = vmatprep.subr.bf16.mxu0 0
    %565 = vmatpush1.bf16.msra.mxu0 0
    %566 = vmatprep.subr.bf16.mxu0 0
    %567 = vmatpush1.bf16.msra.mxu0 0
    %568 = vmatprep.subr.bf16.mxu0 0
    %569 = vmatpush1.bf16.msra.mxu0 0
    %570 = vmatprep.subr.bf16.mxu0 0
    %571 = vmatpush1.bf16.msra.mxu0 0
    %572 = vmatprep.mubr.bf16.mxu0 %v529
    %573 = vmatmul.mubr.bf16.gmra.mrb[0].mxu0 %v424
    %v574 = vpop.f32.mrb[0].mxu0
    %v575 = vadd.f32 0.0, %v574
    %v576 = vpop.f32.mrb[0].mxu0
    %v577 = vpop.f32.mrb[0].mxu0
    %v578 = vadd.f32 0.0, %v577
    %v579 = vpop.f32.mrb[0].mxu0
    %580 = vmatprep.mubr.bf16.mxu0 %v532
    %581 = vmatmul.mubr.bf16.gmra.mrb[0].mxu0 %v426
    %v582 = vpop.f32.mrb[0].mxu0
    %v583 = vadd.f32 0.0, %v582
    %v584 = vpop.f32.mrb[0].mxu0
    %v585 = vpop.f32.mrb[0].mxu0
    %v586 = vadd.f32 0.0, %v585
    %v587 = vpop.f32.mrb[0].mxu0
    %588 = vmatprep.mubr.bf16.mxu0 %v535
    %589 = vmatmul.mubr.bf16.gmra.mrb[0].mxu0 %v428
    %v590 = vpop.f32.mrb[0].mxu0
    %v591 = vadd.f32 0.0, %v590
    %v592 = vpop.f32.mrb[0].mxu0
    %v593 = vpop.f32.mrb[0].mxu0
    %v594 = vadd.f32 0.0, %v593
    %v595 = vpop.f32.mrb[0].mxu0
    %596 = vmatprep.mubr.bf16.mxu0 %v538
    %597 = vmatmul.mubr.bf16.gmra.mrb[0].mxu0 %v430
    %v598 = vpop.f32.mrb[0].mxu0
    %v599 = vadd.f32 0.0, %v598
    %v600 = vpop.f32.mrb[0].mxu0
    %v601 = vpop.f32.mrb[0].mxu0
    %v602 = vadd.f32 0.0, %v601
    %v603 = vpop.f32.mrb[0].mxu0
    %604 = vdwg.mxu0
    %v605 = vld [vmem:[%s4] sm:$0x1]
    %v607 = vlaneseq
    %v608 = vshrl.u32 %v607, 7
    %v609 = vsub.s32 0, %v608
    %v610 = vrot.slane %v605, %v609
    %v612 = vadd.f32 %v575, %v610
    %v613 = vadd.f32 %v578, %v610
    %v614 = vadd.f32 %v583, %v610
    %v615 = vadd.f32 %v586, %v610
    %v616 = vadd.f32 %v591, %v610
    %v617 = vadd.f32 %v594, %v610
    %v618 = vadd.f32 %v599, %v610
    %v619 = vadd.f32 %v602, %v610
    %vm620 = vcmask 56320
    %621 = vst.msk [vmem:[%s5] sm:$0xff] %vm620, %v612
    %622 = vst.msk [vmem:[%s5 + $0x8] sm:$0xff] %vm620, %v613
    %623 = vst.msk [vmem:[%s5 + $0x10] sm:$0xff] %vm620, %v614
    %624 = vst.msk [vmem:[%s5 + $0x18] sm:$0xff] %vm620, %v615
    %625 = vst.msk [vmem:[%s5 + $0x20] sm:$0xff] %vm620, %v616
    %626 = vst.msk [vmem:[%s5 + $0x28] sm:$0xff] %vm620, %v617
    %627 = vst.msk [vmem:[%s5 + $0x30] sm:$0xff] %vm620, %v618
    %628 = vst.msk [vmem:[%s5 + $0x38] sm:$0xff] %vm620, %v619
    // Predicated region
    $region34: #{tpu_custom_call.1} parent=1 // pred_check
      _
    $region35: #{tpu_custom_call.1} parent=1 // pred_check_branch
      %630 = sbr.rel (0) target = $region37
    $region36: #{tpu_custom_call.1} parent=1 // pred_region
      _
    $region37: #{tpu_custom_call.1} parent=1 // pred_fallthru
      _
    // Predicated region
    $region38: #{tpu_custom_call.1} parent=1 // pred_check
      _
    $region39: #{tpu_custom_call.1} parent=1 // pred_check_branch
      %632 = sbr.rel (0) target = $region41
    $region40: #{tpu_custom_call.1} parent=1 // pred_region
      _
    $region41: #{tpu_custom_call.1} parent=1 // pred_fallthru
      _
    %633 = vsyncpa [#allocation3], 1
    %634 = vsyncpa [#allocation5], 1

</llo_original>
